<compile_context>
chip_gen: v7x
topology: tpu7x:2x2x1
jax: 0.10.0
libtpu: 0.0.40
codegen_flags: <defaults>
</compile_context>

<pallas_src>
import functools

import jax
import jax.numpy as jnp
from jax import lax
from jax.experimental import pallas as pl
from jax.experimental.pallas import tpu as pltpu

LANES = 128
NUM_CORE_SPLITS = 2            # leading "parallel" grid axis (2 TCs on v7x)
TILE_BYTES_PER_INPUT = 2 << 20  # ~2 MiB/input tile -> ~8 MiB double-buffered


def _round_up(x, m):
    return (x + m - 1) // m * m


def _loss_n_l1_kernel(pred_ref, tgt_ref, part_ref, acc_sq, acc_abs, *,
                      tile_rows, full_rows, rem_cols, needs_mask):
    # pred_ref, tgt_ref : (tile_rows, 128) VMEM tiles (native input dtype)
    # part_ref          : (1, 2, 8, 128) f32 VMEM output block (one per core)
    # acc_sq, acc_abs   : (8, 128) f32 VMEM vector accumulators
    c = pl.program_id(0)
    i = pl.program_id(1)
    steps = pl.num_programs(1)

    @pl.when(i == 0)
    def _init():
        acc_sq[...] = jnp.zeros_like(acc_sq)
        acc_abs[...] = jnp.zeros_like(acc_abs)

    p = pred_ref[...].astype(jnp.float32)
    t = tgt_ref[...].astype(jnp.float32)
    d = p - t
    sq = jnp.exp(t * 5.0) * (d * d)   # exp -> EUP slot, muls -> VPU
    ab = jnp.abs(d)

    if needs_mask:
        # Zero out elements past the true element count (partial last block,
        # ragged last 128-lane row, or redundant block from the 2-way split).
        flat = c * steps + i                       # unclamped flat block index
        row = lax.broadcasted_iota(jnp.int32, (tile_rows, LANES), 0)
        col = lax.broadcasted_iota(jnp.int32, (tile_rows, LANES), 1)
        grow = flat * tile_rows + row              # global row index
        keep = grow < full_rows
        if rem_cols:
            keep = keep | ((grow == full_rows) & (col < rem_cols))
        sq = jnp.where(keep, sq, 0.0)
        ab = jnp.where(keep, ab, 0.0)

    if tile_rows % 8 == 0:
        # Fold the tile onto the (8,128) accumulators with pure VPU adds
        # (no per-step XLU reduce).  The reshape is layout-preserving.
        acc_sq[...] += sq.reshape(tile_rows // 8, 8, LANES).sum(axis=0)
        acc_abs[...] += ab.reshape(tile_rows // 8, 8, LANES).sum(axis=0)
    else:
        # Tiny single-block case (rows < 8): one sublane reduce, negligible.
        acc_sq[0:1, :] += sq.sum(axis=0, keepdims=True)
        acc_abs[0:1, :] += ab.sum(axis=0, keepdims=True)

    @pl.when(i == steps - 1)
    def _finalize():
        part_ref[0, 0] = acc_sq[...]
        part_ref[0, 1] = acc_abs[...]


def loss_n_l1(pred, target):
    """0.8 * mean(exp(5*t)*(p-t)^2) + 0.2 * mean(|p-t|), as an f32 scalar."""
    assert pred.shape == target.shape
    n = int(pred.size)
    assert n > 0

    p = pred.reshape(-1)
    t = target.reshape(-1)

    # Only pad to a multiple of 128 lanes when strictly necessary (<=127 elems);
    # typical NN tensors need no pad, so no extra HBM pass over the inputs.
    n128 = _round_up(n, LANES)
    if n128 != n:
        p = jnp.pad(p, (0, n128 - n))
        t = jnp.pad(t, (0, n128 - n))
    rows = n128 // LANES
    p2 = p.reshape(rows, LANES)
    t2 = t.reshape(rows, LANES)

    # Sublane alignment: 8 for 32-bit, 16 for bf16/f16, 32 for 8-bit dtypes.
    sub = max(32 // jnp.dtype(p2.dtype).itemsize,
              32 // jnp.dtype(t2.dtype).itemsize)
    itemsize = max(jnp.dtype(p2.dtype).itemsize, jnp.dtype(t2.dtype).itemsize)
    # ~2 MiB per input tile: big enough to amortize per-step overhead, small
    # enough to fit every generation's default scoped-VMEM limit unflagged.
    max_tile_rows = TILE_BYTES_PER_INPUT // (LANES * itemsize)

    tile_rows = min(max_tile_rows, _round_up(pl.cdiv(rows, NUM_CORE_SPLITS), sub))
    if tile_rows >= rows:
        tile_rows = rows  # full-dim block is legal for any row count

    total_blocks = pl.cdiv(rows, tile_rows)
    steps = pl.cdiv(total_blocks, NUM_CORE_SPLITS)
    covered = NUM_CORE_SPLITS * steps * tile_rows * LANES
    needs_mask = covered != n
    full_rows = n // LANES
    rem_cols = n % LANES

    def in_map(c, i):
        # Clamp so redundant blocks (odd block counts under the 2-way split)
        # issue in-bounds DMAs; their contribution is masked to zero in-kernel.
        return (jnp.minimum(c * steps + i, total_blocks - 1), 0)

    kernel = functools.partial(
        _loss_n_l1_kernel, tile_rows=tile_rows, full_rows=full_rows,
        rem_cols=rem_cols, needs_mask=needs_mask)

    partials = pl.pallas_call(
        kernel,
        out_shape=jax.ShapeDtypeStruct((NUM_CORE_SPLITS, 2, 8, LANES),
                                       jnp.float32),
        grid_spec=pltpu.PrefetchScalarGridSpec(
            num_scalar_prefetch=0,
            grid=(NUM_CORE_SPLITS, steps),          # reduction axis last
            in_specs=[
                pl.BlockSpec((tile_rows, LANES), in_map),
                pl.BlockSpec((tile_rows, LANES), in_map),
            ],
            out_specs=pl.BlockSpec((1, 2, 8, LANES),
                                   lambda c, i: (c, 0, 0, 0)),
            scratch_shapes=[
                pltpu.VMEM((8, LANES), jnp.float32),
                pltpu.VMEM((8, LANES), jnp.float32),
            ],
        ),
        compiler_params=pltpu.CompilerParams(
            dimension_semantics=("parallel", "arbitrary"),
        ),
    )(p2, t2)

    # Tiny epilogue on 2*2*8*128 floats: cross-core / cross-lane reduce and the
    # 0.8 / 0.2 / 1/N scaling.
    sums = jnp.sum(partials, axis=(0, 2, 3), dtype=jnp.float32)
    return (0.8 * sums[0] + 0.2 * sums[1]) / jnp.float32(n)


def ref_loss_n_l1(pred, target):
    """Pure-JAX reference matching the PyTorch module exactly."""
    pred = pred.astype(jnp.float32)
    target = target.astype(jnp.float32)
    w = jnp.exp(target * 5.0)
    weighted_mse = jnp.mean(w * (pred - target) ** 2)
    l1 = jnp.mean(jnp.abs(pred - target))
    return 0.8 * weighted_mse + 0.2 * l1


if __name__ == "__main__":
    key = jax.random.PRNGKey(0)
    k1, k2 = jax.random.split(key)
    pred = jax.random.normal(k1, (2, 4, 16, 16), jnp.float32)
    target = 0.5 * jax.random.normal(k2, (2, 4, 16, 16), jnp.float32)

    out = jax.block_until_ready(loss_n_l1(pred, target))
    ref = jax.block_until_ready(ref_loss_n_l1(pred, target))

    assert out.shape == ()
    assert jnp.allclose(out, ref, rtol=1e-4, atol=1e-5), (
        f"pallas={out} ref={ref} abs_err={jnp.abs(out - ref)}")

    print("KERNEL_OK")
</pallas_src>

<mosaic_0001>
module attributes {stable_mosaic.version = 11 : i64} {
  func.func @_loss_n_l1_kernel(%arg0: i32, %arg1: i32, %arg2: memref<8x128xf32, #tpu.memory_space<vmem>>, %arg3: memref<8x128xf32, #tpu.memory_space<vmem>>, %arg4: memref<1x2x8x128xf32, #tpu.memory_space<vmem>>, %arg5: memref<8x128xf32, #tpu.memory_space<vmem>>, %arg6: memref<8x128xf32, #tpu.memory_space<vmem>>) attributes {dimension_semantics = [#tpu.dimension_semantics<parallel>, #tpu.dimension_semantics<arbitrary>], iteration_bounds = array<i64: 2, 1>, scalar_prefetch = 0 : i64, scratch_operands = 2 : i64, tpu.core_type = #tpu.core_type<tc>, window_params = [{transform_indices = @transform_0, window_bounds = array<i64: 8, 128>}, {transform_indices = @transform_1, window_bounds = array<i64: 8, 128>}, {transform_indices = @transform_2, window_bounds = array<i64: 1, 2, 8, 128>}]} {
    %c0_i32 = arith.constant 0 : i32
    %0 = arith.cmpi eq, %arg1, %c0_i32 : i32
    %1 = arith.extui %0 : i1 to i32
    %c0_i32_0 = arith.constant 0 : i32
    %2 = arith.cmpi ne, %1, %c0_i32_0 : i32
    scf.if %2 {
      %cst_16 = arith.constant 0.000000e+00 : f32
      %25 = vector.broadcast %cst_16 : f32 to vector<8x128xf32>
      %c0_17 = arith.constant 0 : index
      %c0_18 = arith.constant 0 : index
      %26 = vector.load %arg5[%c0_17, %c0_18] : memref<8x128xf32, #tpu.memory_space<vmem>>, vector<8x128xf32>
      tpu.vector_store %arg5[%c0_17, %c0_18], %25 {strides = array<i32>} : memref<8x128xf32, #tpu.memory_space<vmem>>, vector<8x128xf32>,
      %cst_19 = arith.constant 0.000000e+00 : f32
      %27 = vector.broadcast %cst_19 : f32 to vector<8x128xf32>
      %c0_20 = arith.constant 0 : index
      %c0_21 = arith.constant 0 : index
      %28 = vector.load %arg6[%c0_20, %c0_21] : memref<8x128xf32, #tpu.memory_space<vmem>>, vector<8x128xf32>
      tpu.vector_store %arg6[%c0_20, %c0_21], %27 {strides = array<i32>} : memref<8x128xf32, #tpu.memory_space<vmem>>, vector<8x128xf32>,
    } else {
    }
    %c0 = arith.constant 0 : index
    %c0_1 = arith.constant 0 : index
    %3 = vector.load %arg2[%c0, %c0_1] : memref<8x128xf32, #tpu.memory_space<vmem>>, vector<8x128xf32>
    %c0_2 = arith.constant 0 : index
    %c0_3 = arith.constant 0 : index
    %4 = vector.load %arg3[%c0_2, %c0_3] : memref<8x128xf32, #tpu.memory_space<vmem>>, vector<8x128xf32>
    %5 = arith.subf %3, %4 : vector<8x128xf32>
    %cst = arith.constant 5.000000e+00 : f32
    %6 = vector.broadcast %cst : f32 to vector<8x128xf32>
    %7 = arith.mulf %4, %6 : vector<8x128xf32>
    %8 = math.exp %7 : vector<8x128xf32>
    %9 = arith.mulf %5, %5 : vector<8x128xf32>
    %10 = arith.mulf %8, %9 : vector<8x128xf32>
    %11 = math.absf %5 : vector<8x128xf32>
    %c0_4 = arith.constant 0 : index
    %c0_5 = arith.constant 0 : index
    %12 = vector.load %arg5[%c0_4, %c0_5] : memref<8x128xf32, #tpu.memory_space<vmem>>, vector<8x128xf32>
    %13 = vector.shape_cast %10 : vector<8x128xf32> to vector<1x8x128xf32>
    %cst_6 = arith.constant dense<0.000000e+00> : vector<8x128xf32>
    %14 = vector.multi_reduction <add>, %13, %cst_6 [0] : vector<1x8x128xf32> to vector<8x128xf32>
    %15 = arith.addf %12, %14 : vector<8x128xf32>
    %c0_7 = arith.constant 0 : index
    %c0_8 = arith.constant 0 : index
    %16 = vector.load %arg5[%c0_7, %c0_8] : memref<8x128xf32, #tpu.memory_space<vmem>>, vector<8x128xf32>
    tpu.vector_store %arg5[%c0_7, %c0_8], %15 {strides = array<i32>} : memref<8x128xf32, #tpu.memory_space<vmem>>, vector<8x128xf32>,
    %c0_9 = arith.constant 0 : index
    %c0_10 = arith.constant 0 : index
    %17 = vector.load %arg6[%c0_9, %c0_10] : memref<8x128xf32, #tpu.memory_space<vmem>>, vector<8x128xf32>
    %18 = vector.shape_cast %11 : vector<8x128xf32> to vector<1x8x128xf32>
    %cst_11 = arith.constant dense<0.000000e+00> : vector<8x128xf32>
    %19 = vector.multi_reduction <add>, %18, %cst_11 [0] : vector<1x8x128xf32> to vector<8x128xf32>
    %20 = arith.addf %17, %19 : vector<8x128xf32>
    %c0_12 = arith.constant 0 : index
    %c0_13 = arith.constant 0 : index
    %21 = vector.load %arg6[%c0_12, %c0_13] : memref<8x128xf32, #tpu.memory_space<vmem>>, vector<8x128xf32>
    tpu.vector_store %arg6[%c0_12, %c0_13], %20 {strides = array<i32>} : memref<8x128xf32, #tpu.memory_space<vmem>>, vector<8x128xf32>,
    %c0_i32_14 = arith.constant 0 : i32
    %22 = arith.cmpi eq, %arg1, %c0_i32_14 : i32
    %23 = arith.extui %22 : i1 to i32
    %c0_i32_15 = arith.constant 0 : i32
    %24 = arith.cmpi ne, %23, %c0_i32_15 : i32
    scf.if %24 {
      %c0_16 = arith.constant 0 : index
      %c0_17 = arith.constant 0 : index
      %25 = vector.load %arg5[%c0_16, %c0_17] : memref<8x128xf32, #tpu.memory_space<vmem>>, vector<8x128xf32>
      %c0_18 = arith.constant 0 : index
      %c0_19 = arith.constant 0 : index
      %c0_20 = arith.constant 0 : index
      %c0_21 = arith.constant 0 : index
      %26 = vector.load %arg4[%c0_18, %c0_19, %c0_20, %c0_21] : memref<1x2x8x128xf32, #tpu.memory_space<vmem>>, vector<1x1x8x128xf32>
      %27 = vector.shape_cast %26 : vector<1x1x8x128xf32> to vector<8x128xf32>
      %28 = vector.shape_cast %25 : vector<8x128xf32> to vector<1x1x8x128xf32>
      tpu.vector_store %arg4[%c0_18, %c0_19, %c0_20, %c0_21], %28 {strides = array<i32>} : memref<1x2x8x128xf32, #tpu.memory_space<vmem>>, vector<1x1x8x128xf32>,
      %c0_22 = arith.constant 0 : index
      %c0_23 = arith.constant 0 : index
      %29 = vector.load %arg6[%c0_22, %c0_23] : memref<8x128xf32, #tpu.memory_space<vmem>>, vector<8x128xf32>
      %c0_24 = arith.constant 0 : index
      %c1 = arith.constant 1 : index
      %c0_25 = arith.constant 0 : index
      %c0_26 = arith.constant 0 : index
      %30 = vector.load %arg4[%c0_24, %c1, %c0_25, %c0_26] : memref<1x2x8x128xf32, #tpu.memory_space<vmem>>, vector<1x1x8x128xf32>
      %31 = vector.shape_cast %30 : vector<1x1x8x128xf32> to vector<8x128xf32>
      %32 = vector.shape_cast %29 : vector<8x128xf32> to vector<1x1x8x128xf32>
      tpu.vector_store %arg4[%c0_24, %c1, %c0_25, %c0_26], %32 {strides = array<i32>} : memref<1x2x8x128xf32, #tpu.memory_space<vmem>>, vector<1x1x8x128xf32>,
    } else {
    }
    return
  }
  func.func @transform_0(%arg0: i32, %arg1: i32) -> (i32, i32) {
    %c1_i32 = arith.constant 1 : i32
    %0 = arith.muli %arg0, %c1_i32 : i32
    %1 = arith.addi %0, %arg1 : i32
    %c1_i32_0 = arith.constant 1 : i32
    %2 = arith.minsi %1, %c1_i32_0 : i32
    %c0_i32 = arith.constant 0 : i32
    %c0_i32_1 = arith.constant 0 : i32
    return %2, %c0_i32 : i32, i32
  }
  func.func @transform_1(%arg0: i32, %arg1: i32) -> (i32, i32) {
    %c1_i32 = arith.constant 1 : i32
    %0 = arith.muli %arg0, %c1_i32 : i32
    %1 = arith.addi %0, %arg1 : i32
    %c1_i32_0 = arith.constant 1 : i32
    %2 = arith.minsi %1, %c1_i32_0 : i32
    %c0_i32 = arith.constant 0 : i32
    %c0_i32_1 = arith.constant 0 : i32
    return %2, %c0_i32 : i32, i32
  }
  func.func @transform_2(%arg0: i32, %arg1: i32) -> (i32, i32, i32, i32) {
    %c0_i32 = arith.constant 0 : i32
    %c0_i32_0 = arith.constant 0 : i32
    %c0_i32_1 = arith.constant 0 : i32
    %c0_i32_2 = arith.constant 0 : i32
    return %arg0, %c0_i32, %c0_i32_0, %c0_i32_1 : i32, i32, i32, i32
  }
}

</mosaic_0001>

<llo_original>
// kernel: tpu_custom_call.1
$region0: #{tpu_custom_call.1}
  #allocation0 [shape = 'u32[]', space=smem, size = 0x4, offset = 0x4, fixed_abs, tag = 'smem constant byte address 0x4 - core index']
  #allocation1 [shape = 'u32[144,128]{1,0:T(1,128)}', space=vmem, size = 0x12000, scoped, tag = 'internal scratch']
  #allocation2 [shape = 'f32[8,128]{1,0:T(8,128)}', space=vmem, size = 0x1000, scoped, tag = 'scratch operand']
  #allocation3 [shape = 'f32[8,128]{1,0:T(8,128)}', space=vmem, size = 0x1000, scoped, tag = 'scratch operand']
  %s0 = inlined_call_operand.hbm [shape: f32[16,128], index: 0, kind: input, shape index: {}]
  %s1 = inlined_call_operand.hbm [shape: f32[16,128], index: 1, kind: input, shape index: {}]
  %s2 = inlined_call_operand.hbm [shape: f32[2,2,8,128], index: 2, kind: output, shape index: {}]
  %s3 = sld [smem:[#allocation0]]
  $region57: #{tpu_custom_call.1} parent=0
    _
  %s5 = ssub.s32 1, %s3
  %s6 = scalar_select 0, %s5, %s3
  $region1: #{tpu_custom_call.1} parent=0
    #allocation4 [shape = 'u8[8192]{0}', space=vmem, size = 0x2000, scoped, tag = 'input window, operand 0']
    #allocation5 [shape = 's32[2]{0}', space=sflag, size = 0x8, scoped, tag = 'scoped memory for tpu_custom_call.1']
    #allocation6 [shape = 's32[2]{0}', space=sflag, size = 0x8, scoped, tag = 'scoped memory for tpu_custom_call.1']
    #allocation7 [shape = 'u8[8192]{0}', space=vmem, size = 0x2000, scoped, tag = 'input window, operand 1']
    #allocation8 [shape = 's32[2]{0}', space=sflag, size = 0x8, scoped, tag = 'scoped memory for tpu_custom_call.1']
    #allocation9 [shape = 'u8[16384]{0}', space=vmem, size = 0x4000, scoped, tag = 'output window, operand 0']
    %7 = vsyncpa [#allocation5], 0
    %s8 = scalar_lea.sflag [#allocation5], 1
    %9 = vsyncpa %s8, 0
    %10 = vsyncpa [#allocation8], 0
    %s11 = scalar_lea.sflag [#allocation8], 1
    %12 = vsyncpa %s11, 0
    %13 = vsyncpa [#allocation6], 0
    %s14 = scalar_lea.sflag [#allocation6], 1
    %15 = vsyncpa %s14, 0
    loop: start=0, step=1, limit=4
    $region2: #{tpu_custom_call.1} parent=1 // loop_pre_header
      _
    $region3: #{tpu_custom_call.1} parent=1 // loop_header
      %s17 = sphi 0, %s21
      %p18 = scmp.ge.s32.totalorder %s17, 4
      %s24 = sphi 0, %s36
      %s25 = sphi 0, %s32
      %s26 = sphi 0, %s24
      %s27 = sphi 0, %s25
      %s28 = sphi 0, %s26
      %s29 = sphi 0, %s27
      %s45 = sphi 0, %s47
      %s48 = sphi 0, %s45
      %s49 = sphi 0, %s48
      %s65 = sphi 0, %s49
      %s77 = sphi 0, %s79
      %s80 = sphi 0, %s77
      %s81 = sphi 0, %s80
      %s97 = sphi 0, %s81
      %s103 = sphi 0, %s105
      %s106 = sphi 0, %s103
      %s107 = sphi 0, %s106
      %s123 = sphi 0, %s107
    $region4: #{tpu_custom_call.1} parent=1 // loop_header_branch
      %20 = sbr.rel (%p18) target = $region8
    $region5: #{tpu_custom_call.1} parent=1 // loop_body
      %s22 = ssub.s32 %s17, 1
      %s23 = ssub.s32 %s17, 2
      %s30 = sadd.s32 1, %s25
      %p31 = scmp.ge.s32.totalorder %s30, 1
      %s32 = scalar_select %p31, 0, %s30
      %s33 = sadd.s32 1, %s24
      %s34 = scalar_select %p31, %s33, %s24
      %p35 = scmp.ge.s32.totalorder %s34, 2
      %s36 = scalar_select %p35, 0, %s34
      %s37 = sadd.s32 %s24, %s25
      %p38 = scmp.lt.s32.totalorder %s37, 1
      %s39 = scalar_select %p38, %s37, 1
      %s40 = sadd.s32 %s36, %s32
      %p41 = scmp.lt.s32.totalorder %s40, 1
      %s42 = scalar_select %p41, %s40, 1
      %s43 = ssub.s32 %s39, %s42
      %p44 = scmp.eq.s32.totalorder %s43, 0
      %s46 = sadd.s32 %s45, 1
      %s47 = scalar_select %p44, %s45, %s46
      %p50 = pneg %p44
      %p51 = scmp.eq.s32.totalorder %s17, 1
      %p52 = por %p50, %p51
      %p53 = scmp.ne.s32.totalorder %s45, %s48
      %p54 = scmp.eq.s32.totalorder %s17, 0
      %p55 = por %p53, %p54
      %p56 = scmp.ne.s32.totalorder %s45, %s48
      %p57 = scmp.eq.s32.totalorder %s22, 1
      %p58 = por %p56, %p57
      %p59 = scmp.ne.s32.totalorder %s48, %s49
      %p60 = scmp.eq.s32.totalorder %s22, 0
      %p61 = por %p59, %p60
      %p62 = scmp.ne.s32.totalorder %s48, %s49
      %p63 = scmp.eq.s32.totalorder %s23, 1
      %p64 = por %p62, %p63
      %p66 = scmp.ne.s32.totalorder %s49, %s65
      %p67 = scmp.eq.s32.totalorder %s23, 0
      %p68 = por %p66, %p67
      %s69 = sadd.s32 %s24, %s25
      %p70 = scmp.lt.s32.totalorder %s69, 1
      %s71 = scalar_select %p70, %s69, 1
      %s72 = sadd.s32 %s36, %s32
      %p73 = scmp.lt.s32.totalorder %s72, 1
      %s74 = scalar_select %p73, %s72, 1
      %s75 = ssub.s32 %s71, %s74
      %p76 = scmp.eq.s32.totalorder %s75, 0
      %s78 = sadd.s32 %s77, 1
      %s79 = scalar_select %p76, %s77, %s78
      %p82 = pneg %p76
      %p83 = scmp.eq.s32.totalorder %s17, 1
      %p84 = por %p82, %p83
      %p85 = scmp.ne.s32.totalorder %s77, %s80
      %p86 = scmp.eq.s32.totalorder %s17, 0
      %p87 = por %p85, %p86
      %p88 = scmp.ne.s32.totalorder %s77, %s80
      %p89 = scmp.eq.s32.totalorder %s22, 1
      %p90 = por %p88, %p89
      %p91 = scmp.ne.s32.totalorder %s80, %s81
      %p92 = scmp.eq.s32.totalorder %s22, 0
      %p93 = por %p91, %p92
      %p94 = scmp.ne.s32.totalorder %s80, %s81
      %p95 = scmp.eq.s32.totalorder %s23, 1
      %p96 = por %p94, %p95
      %p98 = scmp.ne.s32.totalorder %s81, %s97
      %p99 = scmp.eq.s32.totalorder %s23, 0
      %p100 = por %p98, %p99
      %s101 = ssub.s32 %s24, %s36
      %p102 = scmp.eq.s32.totalorder %s101, 0
      %s104 = sadd.s32 %s103, 1
      %s105 = scalar_select %p102, %s103, %s104
      %p108 = pneg %p102
      %p109 = scmp.eq.s32.totalorder %s17, 1
      %p110 = por %p108, %p109
      %p111 = scmp.ne.s32.totalorder %s103, %s106
      %p112 = scmp.eq.s32.totalorder %s17, 0
      %p113 = por %p111, %p112
      %p114 = scmp.ne.s32.totalorder %s103, %s106
      %p115 = scmp.eq.s32.totalorder %s22, 1
      %p116 = por %p114, %p115
      %p117 = scmp.ne.s32.totalorder %s106, %s107
      %p118 = scmp.eq.s32.totalorder %s22, 0
      %p119 = por %p117, %p118
      %p120 = scmp.ne.s32.totalorder %s106, %s107
      %p121 = scmp.eq.s32.totalorder %s23, 1
      %p122 = por %p120, %p121
      %p124 = scmp.ne.s32.totalorder %s107, %s123
      %p125 = scmp.eq.s32.totalorder %s23, 0
      %p126 = por %p124, %p125
      %p127 = scmp.le.s32.totalorder 1, %s17
      %p128 = scmp.lt.s32.totalorder %s17, 3
      %p129 = pnand %p127, %p128
      %p130 = pneg %p129
      // Predicated region
      $region9: #{tpu_custom_call.1} parent=5 // pred_check
        _
      $region10: #{tpu_custom_call.1} parent=5 // pred_check_branch
        %132 = sbr.rel (%p129) target = $region12
      $region11: #{tpu_custom_call.1} parent=5 // pred_region
        %s133 = ssub.s32 %s17, 1
      $region12: #{tpu_custom_call.1} parent=5 // pred_fallthru
        _
      %p134 = scmp.lt.s32.totalorder %s17, 2
      // Predicated region
      $region13: #{tpu_custom_call.1} parent=5 // pred_check
        %p135 = pneg %p134
      $region14: #{tpu_custom_call.1} parent=5 // pred_check_branch
        %137 = sbr.rel (%p135) target = $region16
      $region15: #{tpu_custom_call.1} parent=5 // pred_region
        // Predicated region
        $region17: #{tpu_custom_call.1} parent=15 // pred_check
          %p138 = pneg %p55
        $region18: #{tpu_custom_call.1} parent=15 // pred_check_branch
          %140 = sbr.rel (%p138) target = $region20
        $region19: #{tpu_custom_call.1} parent=15 // pred_region
          %s141 = sand.u32 %s45, 1
          %s142 = scalar_lea.sflag [#allocation5], %s141
          %s143 = sand.u32 %s45, 1
          %s144 = smul.addr %s143, 8
          %s145 = scalar_lea.vmem [#allocation4], %s144
          %s146 = sadd.s32 %s24, %s25
          %p147 = scmp.lt.s32.totalorder %s146, 1
          %s148 = scalar_select %p147, %s146, 1
          %s150 = ssub.s32 128, 128
          %151 = vsyncadd %s142, %s150
          %s152 = smul.addr %s148, 128
          %s153 = scalar_lea.hbm %s0, %s152
          %s155 = sshll.u32 %s145, 4
          %s156 = int_to_ptr.vmem [resolvable:$true] %s155
          %158 = dma.hbm_to_vmem [thread:$0]  %s153, 128, %s156, %s142
        $region20: #{tpu_custom_call.1} parent=15 // pred_fallthru
          _
        // Predicated region
        $region21: #{tpu_custom_call.1} parent=15 // pred_check
          %p159 = pneg %p87
        $region22: #{tpu_custom_call.1} parent=15 // pred_check_branch
          %161 = sbr.rel (%p159) target = $region24
        $region23: #{tpu_custom_call.1} parent=15 // pred_region
          %s162 = sand.u32 %s77, 1
          %s163 = scalar_lea.sflag [#allocation8], %s162
          %s164 = sand.u32 %s77, 1
          %s165 = smul.addr %s164, 8
          %s166 = scalar_lea.vmem [#allocation7], %s165
          %s167 = sadd.s32 %s24, %s25
          %p168 = scmp.lt.s32.totalorder %s167, 1
          %s169 = scalar_select %p168, %s167, 1
          %s171 = ssub.s32 128, 128
          %172 = vsyncadd %s163, %s171
          %s173 = smul.addr %s169, 128
          %s174 = scalar_lea.hbm %s1, %s173
          %s176 = sshll.u32 %s166, 4
          %s177 = int_to_ptr.vmem [resolvable:$true] %s176
          %179 = dma.hbm_to_vmem [thread:$0]  %s174, 128, %s177, %s163
        $region24: #{tpu_custom_call.1} parent=15 // pred_fallthru
          _
      $region16: #{tpu_custom_call.1} parent=5 // pred_fallthru
        _
      %p180 = scmp.le.s32.totalorder 1, %s17
      %p181 = scmp.lt.s32.totalorder %s17, 3
      %p182 = pnand %p180, %p181
      %p183 = pneg %p182
      // Predicated region
      $region25: #{tpu_custom_call.1} parent=5 // pred_check
        _
      $region26: #{tpu_custom_call.1} parent=5 // pred_check_branch
        %185 = sbr.rel (%p182) target = $region28
      $region27: #{tpu_custom_call.1} parent=5 // pred_region
        %s186 = ssub.s32 %s17, 1
        %s187 = sand.u32 %s48, 1
        %s188 = scalar_lea.sflag [#allocation5], %s187
        %s189 = sand.u32 %s48, 1
        %s190 = smul.addr %s189, 8
        %s191 = scalar_lea.vmem [#allocation4], %s190
        // Predicated region
        $region29: #{tpu_custom_call.1} parent=27 // pred_check
          %p192 = pneg %p61
        $region30: #{tpu_custom_call.1} parent=27 // pred_check_branch
          %194 = sbr.rel (%p192) target = $region32
        $region31: #{tpu_custom_call.1} parent=27 // pred_region
          %195 = dma.done %s188, 128
        $region32: #{tpu_custom_call.1} parent=27 // pred_fallthru
          _
        %s196 = sand.u32 %s80, 1
        %s197 = scalar_lea.sflag [#allocation8], %s196
        %s198 = sand.u32 %s80, 1
        %s199 = smul.addr %s198, 8
        %s200 = scalar_lea.vmem [#allocation7], %s199
        // Predicated region
        $region33: #{tpu_custom_call.1} parent=27 // pred_check
          %p201 = pneg %p93
        $region34: #{tpu_custom_call.1} parent=27 // pred_check_branch
          %203 = sbr.rel (%p201) target = $region36
        $region35: #{tpu_custom_call.1} parent=27 // pred_region
          %204 = dma.done %s197, 128
        $region36: #{tpu_custom_call.1} parent=27 // pred_fallthru
          _
        %s205 = sand.u32 %s48, 1
        %s206 = scalar_lea.sflag [#allocation5], %s205
        %s207 = sand.u32 %s48, 1
        %s208 = smul.addr %s207, 8
        %s209 = scalar_lea.vmem [#allocation4], %s208
        %p210 = pneg %p61
        %p211 = pneg %p58
        %s212 = sand.u32 %s80, 1
        %s213 = scalar_lea.sflag [#allocation8], %s212
        %s214 = sand.u32 %s80, 1
        %s215 = smul.addr %s214, 8
        %s216 = scalar_lea.vmem [#allocation7], %s215
        %p217 = pneg %p93
        %p218 = pneg %p90
        %p219 = pneg %p119
        %p220 = pneg %p116
        %s221 = sand.u32 %s106, 1
        %s222 = scalar_lea.sflag [#allocation6], %s221
        %s223 = sand.u32 %s106, 1
        %s224 = smul.addr %s223, 16
        %s225 = scalar_lea.vmem [#allocation9], %s224
        %s226 = sadd.s32 %s26, %s27
        %p227 = scmp.lt.s32.totalorder %s226, 1
        %s228 = scalar_select %p227, %s226, 1
        %s229 = sadd.s32 %s26, %s27
        %p230 = scmp.lt.s32.totalorder %s229, 1
        %s231 = scalar_select %p230, %s229, 1
        %p232 = scmp.eq.s32.totalorder %s27, 0
        // Predicated region
        $region37: #{tpu_custom_call.1} parent=27 // pred_check
          %p233 = pneg %p232
        $region38: #{tpu_custom_call.1} parent=27 // pred_check_branch
          %235 = sbr.rel (%p233) target = $region40
        $region39: #{tpu_custom_call.1} parent=27 // pred_region
          %236 = vst [vmem:[#allocation2] sm:$0xff] 0.0
          %237 = vst [vmem:[#allocation3] sm:$0xff] 0.0
        $region40: #{tpu_custom_call.1} parent=27 // pred_fallthru
          _
        %v238 = vld [vmem:[%s191] sm:$0xff]
        %v239 = vld [vmem:[%s200] sm:$0xff]
        %v240 = vsub.f32 %v238, %v239
        %v241 = vmul.f32 %v239, 5.0
        %v242 = vmul.f32 %v241, 1.442695
        %v243 = vpow.pop %v242
        %v244 = vmul.f32 %v240, %v240
        %v245 = vmul.f32 %v243, %v244
        %v246 = vand.u32 2147483647, %v240
        %v247 = vld [vmem:[#allocation2] sm:$0xff]
        %v248 = vadd.f32 %v245, 0.0
        %v249 = vadd.f32 %v247, %v248
        %250 = vst [vmem:[#allocation2] sm:$0xff] %v249
        %v251 = vld [vmem:[#allocation3] sm:$0xff]
        %v252 = vadd.f32 %v246, 0.0
        %v253 = vadd.f32 %v251, %v252
        %254 = vst [vmem:[#allocation3] sm:$0xff] %v253
        // Predicated region
        $region41: #{tpu_custom_call.1} parent=27 // pred_check
          %p255 = pneg %p232
        $region42: #{tpu_custom_call.1} parent=27 // pred_check_branch
          %257 = sbr.rel (%p255) target = $region44
        $region43: #{tpu_custom_call.1} parent=27 // pred_region
          %v258 = vld [vmem:[#allocation2] sm:$0xff]
          %259 = vst [vmem:[%s225] sm:$0xff] %v258
          %v260 = vld [vmem:[#allocation3] sm:$0xff]
          %s261 = scalar_lea.vmem %s225, 8 [#allocation9]
          %262 = vst [vmem:[%s261] sm:$0xff] %v260
        $region44: #{tpu_custom_call.1} parent=27 // pred_fallthru
          _
        %s263 = sand.u32 %s106, 1
        %s264 = scalar_lea.sflag [#allocation6], %s263
        %s265 = sand.u32 %s106, 1
        %s266 = smul.addr %s265, 16
        %s267 = scalar_lea.vmem [#allocation9], %s266
        // Predicated region
        $region45: #{tpu_custom_call.1} parent=27 // pred_check
          %p268 = pneg %p116
        $region46: #{tpu_custom_call.1} parent=27 // pred_check_branch
          %270 = sbr.rel (%p268) target = $region48
        $region47: #{tpu_custom_call.1} parent=27 // pred_region
          %s272 = ssub.s32 256, 256
          %273 = vsyncadd %s264, %s272
          %s274 = smul.addr %s26, 2
          %s275 = smul.addr %s274, 128
          %s276 = scalar_lea.hbm %s2, %s275
          %s277 = sshll.u32 %s267, 4
          %s278 = int_to_ptr.vmem [resolvable:$true] %s277
          %283 = dma.vmem_to_hbm [thread:$0]  %s278, 256, %s276, %s264, 128, 128, 8
        $region48: #{tpu_custom_call.1} parent=27 // pred_fallthru
          _
      $region28: #{tpu_custom_call.1} parent=5 // pred_fallthru
        _
      %p284 = scmp.le.s32.totalorder 2, %s17
      // Predicated region
      $region49: #{tpu_custom_call.1} parent=5 // pred_check
        %p285 = pneg %p284
      $region50: #{tpu_custom_call.1} parent=5 // pred_check_branch
        %287 = sbr.rel (%p285) target = $region52
      $region51: #{tpu_custom_call.1} parent=5 // pred_region
        %s288 = ssub.s32 %s17, 2
        // Predicated region
        $region53: #{tpu_custom_call.1} parent=51 // pred_check
          %p289 = pneg %p122
        $region54: #{tpu_custom_call.1} parent=51 // pred_check_branch
          %291 = sbr.rel (%p289) target = $region56
        $region55: #{tpu_custom_call.1} parent=51 // pred_region
          %s292 = sand.u32 %s107, 1
          %s293 = scalar_lea.sflag [#allocation6], %s292
          %s294 = sand.u32 %s107, 1
          %s295 = smul.addr %s294, 16
          %s296 = scalar_lea.vmem [#allocation9], %s295
          %297 = dma.done %s293, 256
        $region56: #{tpu_custom_call.1} parent=51 // pred_fallthru
          _
      $region52: #{tpu_custom_call.1} parent=5 // pred_fallthru
        _
    $region6: #{tpu_custom_call.1} parent=1 // loop_footer
      %s21 = sadd.s32 1, %s17
    $region7: #{tpu_custom_call.1} parent=1 // loop_footer_branch
      %16 = sbr.rel target = $region3
    $region8: #{tpu_custom_call.1} parent=1 // loop_exit
      _
    %298 = vsyncpa [#allocation5], 1
    %s299 = scalar_lea.sflag [#allocation5], 1
    %300 = vsyncpa %s299, 1
    %301 = vsyncpa [#allocation8], 1
    %s302 = scalar_lea.sflag [#allocation8], 1
    %303 = vsyncpa %s302, 1
    %304 = vsyncpa [#allocation6], 1
    %s305 = scalar_lea.sflag [#allocation6], 1
    %306 = vsyncpa %s305, 1

</llo_original>
